<compile_context>
chip_gen: v5e
topology: v5e:2x2
jax: 0.10.0
libtpu: 0.0.40
codegen_flags: <defaults>
</compile_context>

<pallas_src>
import functools

import jax
import jax.numpy as jnp
from jax.experimental import pallas as pl
from jax.experimental.pallas import tpu as pltpu

_LANE = 128


def _round_up(x, m):
    return (x + m - 1) // m * m


def _cdiv(a, b):
    return (a + b - 1) // b


# --------------------------------------------------------------------------- #
# Kernel
# --------------------------------------------------------------------------- #
def _adapter_kernel(x_ref, w1t_ref, w2t_ref, o_ref, *, ratio):
    # x_ref:   (tb, c_pad)      one batch tile of inputs (compute dtype)
    # w1t_ref: (c_pad, h_pad)   W1.T, zero-padded, VMEM-resident across the grid
    # w2t_ref: (h_pad, c_pad)   W2.T, zero-padded, VMEM-resident across the grid
    # o_ref:   (tb, c_pad)
    x = x_ref[...]
    # First Linear + ReLU: native-dtype MXU operands, f32 accumulation.
    h = jnp.dot(x, w1t_ref[...], preferred_element_type=jnp.float32)
    h = jnp.maximum(h, 0.0).astype(x.dtype)          # back to compute dtype for MXU #2
    # Second Linear + ReLU.
    y = jnp.dot(h, w2t_ref[...], preferred_element_type=jnp.float32)
    y = jnp.maximum(y, 0.0)
    if ratio is not None:
        # Fused CLIP-Adapter residual blend: saves one HBM pass over x downstream.
        y = ratio * y + (1.0 - ratio) * x.astype(jnp.float32)
    o_ref[...] = y.astype(o_ref.dtype)


# --------------------------------------------------------------------------- #
# One-time hardware / capability probes
# --------------------------------------------------------------------------- #
@functools.lru_cache(maxsize=None)
def _vmem_capacity_bytes():
    try:
        return int(pltpu.get_tpu_info().vmem_capacity_bytes)
    except Exception:  # off-TPU / older jax: assume the smallest generation (v7x, 64 MiB)
        return 64 << 20


def _probe_kernel(w_ref, o_ref):
    o_ref[...] = w_ref[...] + 1.0


@functools.lru_cache(maxsize=None)
def _single_buffer_weights_ok():
    """One-time check that pl.Buffered(1) (single-buffered grid-invariant operand)
    compiles & runs on this jax/libtpu.  The probe is a fixed tiny kernel, so a
    failure here can only mean the feature is unsupported -- it never masks errors
    in the real adapter kernel (which is compiled without any try/except)."""
    if not hasattr(pl, "Buffered"):
        return False
    try:
        f = pl.pallas_call(
            _probe_kernel,
            out_shape=jax.ShapeDtypeStruct((8, 128), jnp.float32),
            grid_spec=pltpu.PrefetchScalarGridSpec(
                num_scalar_prefetch=0,
                grid=(2,),
                in_specs=[pl.BlockSpec((8, 128), lambda i: (0, 0),
                                       pipeline_mode=pl.Buffered(1))],
                out_specs=pl.BlockSpec((8, 128), lambda i: (0, 0)),
            ),
        )
        jax.block_until_ready(f(jnp.zeros((8, 128), jnp.float32)))
        return True
    except Exception:  # capability probe only; disables Buffered(1), nothing else
        return False


# --------------------------------------------------------------------------- #
# Tiling / pallas_call construction (cached, hoisted out of the per-step path)
# --------------------------------------------------------------------------- #
def _select_tiling(n, c_pad, h_pad, compute_dtype, out_dtype, single_buffer, tb_override):
    in_item = jnp.dtype(compute_dtype).itemsize
    out_item = jnp.dtype(out_dtype).itemsize
    sub = 32 // in_item                       # sublane multiple: 8 (f32), 16 (bf16)

    hw_vmem = _vmem_capacity_bytes()          # 128 MiB (v5e/v6e) / 64 MiB (v7x)
    budget = int(hw_vmem * 0.70)              # headroom for compiler scratch / regalloc

    w_bufs = 1 if single_buffer else 2
    weight_bytes = 2 * c_pad * h_pad * in_item * w_bufs
    # Per-row VMEM: double-buffered x and out tiles + f32 intermediates (h, y).
    per_row = 2 * c_pad * in_item + 2 * c_pad * out_item + 4 * (h_pad + c_pad)

    tb_max = (budget - weight_bytes) // per_row
    tb_max = max(sub, (tb_max // sub) * sub)
    tb_max = min(tb_max, 4096)                # per-step overhead already <<1% here
    # NOTE: for very large c_in (>=4096 on v7x) a K-tiled grid over c_pad would be
    # preferable to fully-resident weights; at adapter-sized c_in this budget-based
    # tb cap is sufficient.

    n_sub = _round_up(max(n, 1), sub)
    if tb_override is not None:
        tb = max(sub, _round_up(int(tb_override), sub))
        num_tiles = _cdiv(n_sub, tb)
    else:
        num_tiles = _cdiv(n_sub, tb_max)
        if n_sub >= 2 * sub:
            # v7x megacore: at least 2 (even) batch tiles so both TensorCores get work.
            num_tiles = max(num_tiles, 2)
            if num_tiles % 2:
                num_tiles += 1
            num_tiles = min(num_tiles, n_sub // sub)
        # Balanced tiles: padding waste < one sublane group per tile.
        tb = _round_up(_cdiv(n, num_tiles), sub)
    n_pad = num_tiles * tb

    needed = weight_bytes + tb * per_row
    vmem_limit = min(int(hw_vmem * 0.90), max(32 << 20, int(needed * 1.25)))
    return tb, n_pad, vmem_limit


@functools.lru_cache(maxsize=None)
def _build_adapter_call(n_pad, c_pad, h_pad, tb, compute_dtype_name, out_dtype_name,
                        single_buffer, vmem_limit_bytes, ratio):
    compute_dtype = jnp.dtype(compute_dtype_name)
    out_dtype = jnp.dtype(out_dtype_name)
    kernel = functools.partial(_adapter_kernel, ratio=ratio)

    # Grid-invariant weights: single-buffer when supported (halves weight VMEM,
    # matters most on v7x's 64 MiB).
    w_kwargs = {"pipeline_mode": pl.Buffered(1)} if single_buffer else {}

    flops = 4 * n_pad * c_pad * h_pad                     # two matmuls, 2*M*K*N each
    bytes_accessed = (n_pad * c_pad * (compute_dtype.itemsize + out_dtype.itemsize)
                      + 2 * c_pad * h_pad * compute_dtype.itemsize)

    return pl.pallas_call(
        kernel,
        out_shape=jax.ShapeDtypeStruct((n_pad, c_pad), out_dtype),
        grid_spec=pltpu.PrefetchScalarGridSpec(
            num_scalar_prefetch=0,
            grid=(n_pad // tb,),
            in_specs=[
                pl.BlockSpec((tb, c_pad), lambda i: (i, 0)),                  # x tile
                pl.BlockSpec((c_pad, h_pad), lambda i: (0, 0), **w_kwargs),   # W1.T
                pl.BlockSpec((h_pad, c_pad), lambda i: (0, 0), **w_kwargs),   # W2.T
            ],
            out_specs=pl.BlockSpec((tb, c_pad), lambda i: (i, 0)),
        ),
        compiler_params=pltpu.CompilerParams(
            dimension_semantics=("parallel",),     # batch tiles independent (megacore)
            vmem_limit_bytes=vmem_limit_bytes,
        ),
        cost_estimate=pl.CostEstimate(flops=flops, transcendentals=0,
                                      bytes_accessed=bytes_accessed),
    )


# --------------------------------------------------------------------------- #
# Wrappers
# --------------------------------------------------------------------------- #
def _prep_weights(w1, w2, compute_dtype):
    """Transpose + cast + zero-pad weights once (layout plumbing, not per-step)."""
    hidden, c_in = w1.shape
    assert w2.shape == (c_in, hidden)
    c_pad = _round_up(c_in, _LANE)
    h_pad = _round_up(hidden, _LANE)
    w1t = jnp.transpose(w1).astype(compute_dtype)        # (c_in, hidden)
    w2t = jnp.transpose(w2).astype(compute_dtype)        # (hidden, c_in)
    if (c_pad, h_pad) != (c_in, hidden):
        w1t = jnp.pad(w1t, ((0, c_pad - c_in), (0, h_pad - hidden)))
        w2t = jnp.pad(w2t, ((0, h_pad - hidden), (0, c_pad - c_in)))
    return w1t, w2t


def _adapter_apply(x, w1t, w2t, *, compute_dtype, out_dtype, ratio, single_buffer, tb):
    n, c_in = x.shape
    c_pad, h_pad = w1t.shape
    tb, n_pad, vmem_limit = _select_tiling(n, c_pad, h_pad, compute_dtype, out_dtype,
                                           single_buffer, tb)
    xc = x.astype(compute_dtype)
    if (n_pad, c_pad) != (n, c_in):
        xc = jnp.pad(xc, ((0, n_pad - n), (0, c_pad - c_in)))
    call = _build_adapter_call(n_pad, c_pad, h_pad, tb,
                               jnp.dtype(compute_dtype).name, jnp.dtype(out_dtype).name,
                               single_buffer, vmem_limit,
                               None if ratio is None else float(ratio))
    out = call(xc, w1t, w2t)
    return out[:n, :c_in]


def make_adapter(w1, w2, *, compute_dtype=jnp.bfloat16, out_dtype=None, ratio=None):
    """Preprocess weights once and return a jitted forward: x (N, c_in) -> (N, c_in).

    ratio=None  -> exact nn.Module semantics: ReLU(ReLU(x W1.T) W2.T)
    ratio=r     -> fused CLIP-Adapter blend:  r*adapter(x) + (1-r)*x
    """
    compute_dtype = jnp.dtype(compute_dtype)
    out_dtype = compute_dtype if out_dtype is None else jnp.dtype(out_dtype)
    w1t, w2t = _prep_weights(jnp.asarray(w1), jnp.asarray(w2), compute_dtype)
    single_buffer = _single_buffer_weights_ok()           # one-time probe (outside jit)

    def fwd(x, tb=None):
        return _adapter_apply(x, w1t, w2t, compute_dtype=compute_dtype,
                              out_dtype=out_dtype, ratio=ratio,
                              single_buffer=single_buffer, tb=tb)

    return jax.jit(fwd, static_argnames=("tb",))


def adapter_forward(x, w1, w2, *, tb=None, compute_dtype=jnp.bfloat16,
                    out_dtype=None, ratio=None):
    """One-shot convenience wrapper (prefer make_adapter() in a real loop)."""
    compute_dtype = jnp.dtype(compute_dtype)
    out_dtype = compute_dtype if out_dtype is None else jnp.dtype(out_dtype)
    w1t, w2t = _prep_weights(jnp.asarray(w1), jnp.asarray(w2), compute_dtype)
    single_buffer = _single_buffer_weights_ok()
    return _adapter_apply(x, w1t, w2t, compute_dtype=compute_dtype,
                          out_dtype=out_dtype, ratio=ratio,
                          single_buffer=single_buffer, tb=tb)


def adapter_reference(x, w1, w2):
    h = jnp.maximum(x @ w1.T, 0.0)
    return jnp.maximum(h @ w2.T, 0.0)


# --------------------------------------------------------------------------- #
# Self-test
# --------------------------------------------------------------------------- #
if __name__ == "__main__":
    # Small shapes consistent with Adapter(c_in=32, reduction=4) on (N, c_in) features.
    N, c_in, reduction = 8, 32, 4
    hidden = c_in // reduction

    key = jax.random.PRNGKey(0)
    kx, kw1, kw2, kx2 = jax.random.split(key, 4)

    x = jax.random.normal(kx, (N, c_in), dtype=jnp.float32)
    w1 = jax.random.normal(kw1, (hidden, c_in), dtype=jnp.float32) / jnp.sqrt(c_in)
    w2 = jax.random.normal(kw2, (c_in, hidden), dtype=jnp.float32) / jnp.sqrt(hidden)

    ref = adapter_reference(x, w1, w2)

    # 1) f32 compute path: tight check of the math (zero padding must be exact).
    out_f32 = jax.block_until_ready(adapter_forward(x, w1, w2, compute_dtype=jnp.float32))
    assert out_f32.shape == (N, c_in)
    assert jnp.allclose(out_f32, ref, atol=1e-4, rtol=1e-4), "f32 mismatch vs reference"

    # 2) Production path: weights preprocessed once, jitted wrapper, bf16 MXU/HBM I/O.
    adapter = make_adapter(w1, w2)
    out_bf16 = jax.block_until_ready(adapter(x))
    assert out_bf16.shape == (N, c_in) and out_bf16.dtype == jnp.bfloat16
    assert jnp.allclose(out_bf16.astype(jnp.float32), ref, atol=5e-2, rtol=5e-2), \
        "bf16 mismatch vs reference"

    # 3) Multi-tile grid + batch padding (N not a multiple of the batch tile).
    x2 = jax.random.normal(kx2, (40, c_in), dtype=jnp.float32)
    ref2 = adapter_reference(x2, w1, w2)
    out2 = jax.block_until_ready(adapter(x2, tb=16))      # grid of 3 batch tiles
    assert out2.shape == (40, c_in)
    assert jnp.allclose(out2.astype(jnp.float32), ref2, atol=5e-2, rtol=5e-2), \
        "tiled bf16 mismatch vs reference"

    # 4) Optional fused residual blend (the parent CLIP-Adapter's next op).
    ratio = 0.2
    blended = make_adapter(w1, w2, ratio=ratio)
    out_blend = jax.block_until_ready(blended(x))
    ref_blend = ratio * ref + (1.0 - ratio) * x
    assert jnp.allclose(out_blend.astype(jnp.float32), ref_blend, atol=5e-2, rtol=5e-2), \
        "fused residual blend mismatch vs reference"

    print("KERNEL_OK")
</pallas_src>

<mosaic_0001>
module attributes {stable_mosaic.version = 11 : i64} {
  func.func @_probe_kernel(%arg0: i32, %arg1: memref<8x128xf32, #tpu.memory_space<vmem>>, %arg2: memref<8x128xf32, #tpu.memory_space<vmem>>) attributes {dimension_semantics = [#tpu.dimension_semantics<arbitrary>], iteration_bounds = array<i64: 2>, scalar_prefetch = 0 : i64, scratch_operands = 0 : i64, tpu.core_type = #tpu.core_type<tc>, window_params = [{pipeline_mode = #tpu.pipeline_mode<synchronous>, transform_indices = @transform_0, window_bounds = array<i64: 8, 128>}, {pipeline_mode = #tpu.pipeline_mode<synchronous>, transform_indices = @transform_1, window_bounds = array<i64: 8, 128>}]} {
    %c0 = arith.constant 0 : index
    %c0_0 = arith.constant 0 : index
    %0 = vector.load %arg1[%c0, %c0_0] : memref<8x128xf32, #tpu.memory_space<vmem>>, vector<8x128xf32>
    %cst = arith.constant 1.000000e+00 : f32
    %1 = vector.broadcast %cst : f32 to vector<8x128xf32>
    %2 = arith.addf %0, %1 : vector<8x128xf32>
    %c0_1 = arith.constant 0 : index
    %c0_2 = arith.constant 0 : index
    %3 = vector.load %arg2[%c0_1, %c0_2] : memref<8x128xf32, #tpu.memory_space<vmem>>, vector<8x128xf32>
    tpu.vector_store %arg2[%c0_1, %c0_2], %2 {strides = array<i32>} : memref<8x128xf32, #tpu.memory_space<vmem>>, vector<8x128xf32>,
    return
  }
  func.func @transform_0(%arg0: i32) -> (i32, i32) {
    %c0_i32 = arith.constant 0 : i32
    %c0_i32_0 = arith.constant 0 : i32
    %c0_i32_1 = arith.constant 0 : i32
    return %c0_i32, %c0_i32_0 : i32, i32
  }
  func.func @transform_1(%arg0: i32) -> (i32, i32) {
    %c0_i32 = arith.constant 0 : i32
    %c0_i32_0 = arith.constant 0 : i32
    %c0_i32_1 = arith.constant 0 : i32
    return %c0_i32, %c0_i32_0 : i32, i32
  }
}

module attributes {stable_mosaic.version = 11 : i64} {
  func.func @_adapter_kernel(%arg0: i32, %arg1: memref<8x128xf32, #tpu.memory_space<vmem>>, %arg2: memref<128x128xf32, #tpu.memory_space<vmem>>, %arg3: memref<128x128xf32, #tpu.memory_space<vmem>>, %arg4: memref<8x128xf32, #tpu.memory_space<vmem>>) attributes {dimension_semantics = [#tpu.dimension_semantics<parallel>], iteration_bounds = array<i64: 1>, scalar_prefetch = 0 : i64, scratch_operands = 0 : i64, tpu.core_type = #tpu.core_type<tc>, window_params = [{transform_indices = @transform_0, window_bounds = array<i64: 8, 128>}, {pipeline_mode = #tpu.pipeline_mode<synchronous>, transform_indices = @transform_1, window_bounds = array<i64: 128, 128>}, {pipeline_mode = #tpu.pipeline_mode<synchronous>, transform_indices = @transform_2, window_bounds = array<i64: 128, 128>}, {transform_indices = @transform_3, window_bounds = array<i64: 8, 128>}]} {
    %c0 = arith.constant 0 : index
    %c0_0 = arith.constant 0 : index
    %0 = vector.load %arg1[%c0, %c0_0] : memref<8x128xf32, #tpu.memory_space<vmem>>, vector<8x128xf32>
    %c0_1 = arith.constant 0 : index
    %c0_2 = arith.constant 0 : index
    %1 = vector.load %arg2[%c0_1, %c0_2] : memref<128x128xf32, #tpu.memory_space<vmem>>, vector<128x128xf32>
    %cst = arith.constant dense<0.000000e+00> : vector<8x128xf32>
    %2 = tpu.matmul %0, %1, %cst {dimension_numbers = #tpu.dot_dimension_numbers<[1], [0], [0], [1], [0, 0, 1, 1], [], []>} : vector<8x128xf32>, vector<128x128xf32>, vector<8x128xf32> -> vector<8x128xf32>
    %cst_3 = arith.constant 0.000000e+00 : f32
    %3 = vector.broadcast %cst_3 : f32 to vector<8x128xf32>
    %4 = arith.maximumf %2, %3 : vector<8x128xf32>
    %c0_4 = arith.constant 0 : index
    %c0_5 = arith.constant 0 : index
    %5 = vector.load %arg3[%c0_4, %c0_5] : memref<128x128xf32, #tpu.memory_space<vmem>>, vector<128x128xf32>
    %cst_6 = arith.constant dense<0.000000e+00> : vector<8x128xf32>
    %6 = tpu.matmul %4, %5, %cst_6 {dimension_numbers = #tpu.dot_dimension_numbers<[1], [0], [0], [1], [0, 0, 1, 1], [], []>} : vector<8x128xf32>, vector<128x128xf32>, vector<8x128xf32> -> vector<8x128xf32>
    %cst_7 = arith.constant 0.000000e+00 : f32
    %7 = vector.broadcast %cst_7 : f32 to vector<8x128xf32>
    %8 = arith.maximumf %6, %7 : vector<8x128xf32>
    %c0_8 = arith.constant 0 : index
    %c0_9 = arith.constant 0 : index
    %9 = vector.load %arg4[%c0_8, %c0_9] : memref<8x128xf32, #tpu.memory_space<vmem>>, vector<8x128xf32>
    tpu.vector_store %arg4[%c0_8, %c0_9], %8 {strides = array<i32>} : memref<8x128xf32, #tpu.memory_space<vmem>>, vector<8x128xf32>,
    return
  }
  func.func @transform_0(%arg0: i32) -> (i32, i32) {
    %c0_i32 = arith.constant 0 : i32
    %c0_i32_0 = arith.constant 0 : i32
    return %arg0, %c0_i32 : i32, i32
  }
  func.func @transform_1(%arg0: i32) -> (i32, i32) {
    %c0_i32 = arith.constant 0 : i32
    %c0_i32_0 = arith.constant 0 : i32
    %c0_i32_1 = arith.constant 0 : i32
    return %c0_i32, %c0_i32_0 : i32, i32
  }
  func.func @transform_2(%arg0: i32) -> (i32, i32) {
    %c0_i32 = arith.constant 0 : i32
    %c0_i32_0 = arith.constant 0 : i32
    %c0_i32_1 = arith.constant 0 : i32
    return %c0_i32, %c0_i32_0 : i32, i32
  }
  func.func @transform_3(%arg0: i32) -> (i32, i32) {
    %c0_i32 = arith.constant 0 : i32
    %c0_i32_0 = arith.constant 0 : i32
    return %arg0, %c0_i32 : i32, i32
  }
}

</mosaic_0001>

<llo_original>
// kernel: tpu_custom_call.1
$region0: #{tpu_custom_call.1}
  #allocation0 [shape = 'u32[]', space=smem, size = 0x4, offset = 0x4, fixed_abs, tag = 'smem constant byte address 0x4 - core index']
  #allocation1 [shape = 'u32[72,128]{1,0:T(1,128)}', space=vmem, size = 0x9000, scoped, tag = 'internal scratch']
  %s0 = inlined_call_operand.hbm [shape: f32[8,128], index: 0, kind: input, shape index: {}]
  %s1 = inlined_call_operand.hbm [shape: f32[8,128], index: 1, kind: output, shape index: {}]
  %s2 = sld [smem:[#allocation0]]
  $region41: #{tpu_custom_call.1} parent=0
    _
  %s4 = ssub.s32 1, %s2
  %s5 = scalar_select 0, %s4, %s2
  $region1: #{tpu_custom_call.1} parent=0
    #allocation2 [shape = 'u8[4096]{0}', space=vmem, size = 0x1000, scoped, tag = 'input window, operand 0, single buffered']
    #allocation3 [shape = 's32[2]{0}', space=sflag, size = 0x8, scoped, tag = 'scoped memory for tpu_custom_call.1']
    #allocation4 [shape = 's32[2]{0}', space=sflag, size = 0x8, scoped, tag = 'scoped memory for tpu_custom_call.1']
    #allocation5 [shape = 'u8[4096]{0}', space=vmem, size = 0x1000, scoped, tag = 'output window, operand 0, single buffered']
    %6 = vsyncpa [#allocation3], 0
    %7 = vsyncpa [#allocation4], 0
    loop: start=0, step=1, limit=4
    $region2: #{tpu_custom_call.1} parent=1 // loop_pre_header
      _
    $region3: #{tpu_custom_call.1} parent=1 // loop_header
      %s9 = sphi 0, %s13
      %p10 = scmp.ge.s32.totalorder %s9, 4
      %s17 = sphi 0, %s17
      %s19 = sphi 0, %s17
      %s20 = sphi 0, %s19
      %s34 = sphi 0, %s20
      %s38 = sphi 0, %s38
      %s40 = sphi 0, %s38
      %s41 = sphi 0, %s40
      %s55 = sphi 0, %s41
    $region4: #{tpu_custom_call.1} parent=1 // loop_header_branch
      %12 = sbr.rel (%p10) target = $region8
    $region5: #{tpu_custom_call.1} parent=1 // loop_body
      %s14 = ssub.s32 %s9, 1
      %s15 = ssub.s32 %s9, 2
      %s16 = sadd.s32 %s9, 1
      %s18 = sadd.s32 %s17, 1
      %p21 = scmp.eq.s32.totalorder %s9, 1
      %p22 = scmp.ne.s32.totalorder %s17, %s19
      %p23 = scmp.eq.s32.totalorder %s9, 0
      %p24 = por %p22, %p23
      %p25 = scmp.ne.s32.totalorder %s17, %s19
      %p26 = scmp.eq.s32.totalorder %s14, 1
      %p27 = por %p25, %p26
      %p28 = scmp.ne.s32.totalorder %s19, %s20
      %p29 = scmp.eq.s32.totalorder %s14, 0
      %p30 = por %p28, %p29
      %p31 = scmp.ne.s32.totalorder %s19, %s20
      %p32 = scmp.eq.s32.totalorder %s15, 1
      %p33 = por %p31, %p32
      %p35 = scmp.ne.s32.totalorder %s20, %s34
      %p36 = scmp.eq.s32.totalorder %s15, 0
      %p37 = por %p35, %p36
      %s39 = sadd.s32 %s38, 1
      %p42 = scmp.eq.s32.totalorder %s9, 1
      %p43 = scmp.ne.s32.totalorder %s38, %s40
      %p44 = scmp.eq.s32.totalorder %s9, 0
      %p45 = por %p43, %p44
      %p46 = scmp.ne.s32.totalorder %s38, %s40
      %p47 = scmp.eq.s32.totalorder %s14, 1
      %p48 = por %p46, %p47
      %p49 = scmp.ne.s32.totalorder %s40, %s41
      %p50 = scmp.eq.s32.totalorder %s14, 0
      %p51 = por %p49, %p50
      %p52 = scmp.ne.s32.totalorder %s40, %s41
      %p53 = scmp.eq.s32.totalorder %s15, 1
      %p54 = por %p52, %p53
      %p56 = scmp.ne.s32.totalorder %s41, %s55
      %p57 = scmp.eq.s32.totalorder %s15, 0
      %p58 = por %p56, %p57
      %p59 = scmp.le.s32.totalorder 1, %s9
      %p60 = scmp.lt.s32.totalorder %s9, 3
      %p61 = pnand %p59, %p60
      %p62 = pneg %p61
      // Predicated region
      $region9: #{tpu_custom_call.1} parent=5 // pred_check
        _
      $region10: #{tpu_custom_call.1} parent=5 // pred_check_branch
        %64 = sbr.rel (%p61) target = $region12
      $region11: #{tpu_custom_call.1} parent=5 // pred_region
        %s65 = ssub.s32 %s9, 1
        // Predicated region
        $region13: #{tpu_custom_call.1} parent=11 // pred_check
          %p66 = pneg %p30
        $region14: #{tpu_custom_call.1} parent=11 // pred_check_branch
          %68 = sbr.rel (%p66) target = $region16
        $region15: #{tpu_custom_call.1} parent=11 // pred_region
          %70 = vsyncadd [#allocation3], 0
          %s72 = sshll.u32 %s0, 4
          %s73 = int_to_ptr.hbm [resolvable:$true] %s72
          %s74 = sshll.u32 [#allocation2], 4
          %s75 = int_to_ptr.vmem [resolvable:$true] %s74
          %77 = dma.hbm_to_vmem [thread:$0]  %s73, 128, %s75, [#allocation3]
        $region16: #{tpu_custom_call.1} parent=11 // pred_fallthru
          _
      $region12: #{tpu_custom_call.1} parent=5 // pred_fallthru
        _
      %p78 = scmp.lt.s32.totalorder %s9, 2
      // Predicated region
      $region17: #{tpu_custom_call.1} parent=5 // pred_check
        %p79 = pneg %p78
      $region18: #{tpu_custom_call.1} parent=5 // pred_check_branch
        %81 = sbr.rel (%p79) target = $region20
      $region19: #{tpu_custom_call.1} parent=5 // pred_region
        _
      $region20: #{tpu_custom_call.1} parent=5 // pred_fallthru
        _
      %p82 = scmp.le.s32.totalorder 1, %s9
      %p83 = scmp.lt.s32.totalorder %s9, 3
      %p84 = pnand %p82, %p83
      %p85 = pneg %p84
      // Predicated region
      $region21: #{tpu_custom_call.1} parent=5 // pred_check
        _
      $region22: #{tpu_custom_call.1} parent=5 // pred_check_branch
        %87 = sbr.rel (%p84) target = $region24
      $region23: #{tpu_custom_call.1} parent=5 // pred_region
        %s88 = ssub.s32 %s9, 1
        // Predicated region
        $region25: #{tpu_custom_call.1} parent=23 // pred_check
          %p89 = pneg %p30
        $region26: #{tpu_custom_call.1} parent=23 // pred_check_branch
          %91 = sbr.rel (%p89) target = $region28
        $region27: #{tpu_custom_call.1} parent=23 // pred_region
          %93 = dma.done [#allocation3], 128
        $region28: #{tpu_custom_call.1} parent=23 // pred_fallthru
          _
        %p94 = pneg %p30
        %p95 = pneg %p27
        %p96 = pneg %p51
        %p97 = pneg %p48
        %v98 = vld [vmem:[#allocation2] sm:$0xff]
        %v99 = vadd.f32 %v98, 1.0
        %100 = vst [vmem:[#allocation5] sm:$0xff] %v99
        // Predicated region
        $region29: #{tpu_custom_call.1} parent=23 // pred_check
          %p101 = pneg %p48
        $region30: #{tpu_custom_call.1} parent=23 // pred_check_branch
          %103 = sbr.rel (%p101) target = $region32
        $region31: #{tpu_custom_call.1} parent=23 // pred_region
          %105 = vsyncadd [#allocation4], 0
          %s107 = sshll.u32 [#allocation5], 4
          %s108 = int_to_ptr.vmem [resolvable:$true] %s107
          %s109 = sshll.u32 %s1, 4
          %s110 = int_to_ptr.hbm [resolvable:$true] %s109
          %112 = dma.vmem_to_hbm [thread:$0]  %s108, 128, %s110, [#allocation4]
        $region32: #{tpu_custom_call.1} parent=23 // pred_fallthru
          _
        // Predicated region
        $region33: #{tpu_custom_call.1} parent=23 // pred_check
          %p113 = pneg %p48
        $region34: #{tpu_custom_call.1} parent=23 // pred_check_branch
          %115 = sbr.rel (%p113) target = $region36
        $region35: #{tpu_custom_call.1} parent=23 // pred_region
          %117 = dma.done [#allocation4], 128
        $region36: #{tpu_custom_call.1} parent=23 // pred_fallthru
          _
      $region24: #{tpu_custom_call.1} parent=5 // pred_fallthru
        _
      %p118 = scmp.le.s32.totalorder 2, %s9
      // Predicated region
      $region37: #{tpu_custom_call.1} parent=5 // pred_check
        %p119 = pneg %p118
      $region38: #{tpu_custom_call.1} parent=5 // pred_check_branch
        %121 = sbr.rel (%p119) target = $region40
      $region39: #{tpu_custom_call.1} parent=5 // pred_region
        %s122 = ssub.s32 %s9, 2
      $region40: #{tpu_custom_call.1} parent=5 // pred_fallthru
        _
    $region6: #{tpu_custom_call.1} parent=1 // loop_footer
      %s13 = sadd.s32 1, %s9
    $region7: #{tpu_custom_call.1} parent=1 // loop_footer_branch
      %8 = sbr.rel target = $region3
    $region8: #{tpu_custom_call.1} parent=1 // loop_exit
      _
    %123 = vsyncpa [#allocation3], 1
    %s124 = scalar_lea.sflag [#allocation3], 1
    %125 = vsyncpa %s124, 1
    %126 = vsyncpa [#allocation4], 1
    %s127 = scalar_lea.sflag [#allocation4], 1
    %128 = vsyncpa %s127, 1

// kernel: tpu_custom_call.1
$region0: #{tpu_custom_call.1}
  #allocation0 [shape = 'u32[]', space=smem, size = 0x4, offset = 0x4, fixed_abs, tag = 'smem constant byte address 0x4 - core index']
  #allocation1 [shape = 'u32[72,128]{1,0:T(1,128)}', space=vmem, size = 0x9000, scoped, tag = 'internal scratch']
  %s0 = inlined_call_operand.hbm [shape: f32[8,128], index: 0, kind: input, shape index: {}]
  %s1 = inlined_call_operand.hbm [shape: f32[128,128], index: 1, kind: input, shape index: {}]
  %s2 = inlined_call_operand.hbm [shape: f32[128,128], index: 2, kind: input, shape index: {}]
  %s3 = inlined_call_operand.hbm [shape: f32[8,128], index: 3, kind: output, shape index: {}]
  %s4 = sld [smem:[#allocation0]]
  $region34: #{tpu_custom_call.1} parent=0
    _
  %s6 = ssub.s32 1, %s4
  %s7 = scalar_select 0, %s6, %s4
  $region1: #{tpu_custom_call.1} parent=0
    #allocation2 [shape = 'u8[4096]{0}', space=vmem, size = 0x1000, scoped, tag = 'input window, operand 0, single buffered']
    #allocation3 [shape = 's32[1]{0}', space=sflag, size = 0x4, scoped, tag = 'scoped memory for tpu_custom_call.1']
    #allocation4 [shape = 's32[1]{0}', space=sflag, size = 0x4, scoped, tag = 'scoped memory for tpu_custom_call.1']
    #allocation5 [shape = 'u8[65536]{0}', space=vmem, size = 0x10000, scoped, tag = 'input window, operand 1, single buffered']
    #allocation6 [shape = 's32[1]{0}', space=sflag, size = 0x4, scoped, tag = 'scoped memory for tpu_custom_call.1']
    #allocation7 [shape = 'u8[65536]{0}', space=vmem, size = 0x10000, scoped, tag = 'input window, operand 2, single buffered']
    #allocation8 [shape = 'u8[4096]{0}', space=vmem, size = 0x1000, scoped, tag = 'output window, operand 0, single buffered']
    %8 = vsyncpa [#allocation3], 0
    %9 = vsyncpa [#allocation6], 0
    %10 = vsyncpa [#allocation4], 0
    // Predicated region
    $region2: #{tpu_custom_call.1} parent=1 // pred_check
      _
    $region3: #{tpu_custom_call.1} parent=1 // pred_check_branch
      %12 = sbr.rel (0) target = $region5
    $region4: #{tpu_custom_call.1} parent=1 // pred_region
      %14 = vsyncadd [#allocation3], 0
      %s16 = sshll.u32 %s0, 4
      %s17 = int_to_ptr.hbm [resolvable:$true] %s16
      %s18 = sshll.u32 [#allocation2], 4
      %s19 = int_to_ptr.vmem [resolvable:$true] %s18
      %21 = dma.hbm_to_vmem [thread:$0]  %s17, 128, %s19, [#allocation3]
    $region5: #{tpu_custom_call.1} parent=1 // pred_fallthru
      _
    // Predicated region
    $region6: #{tpu_custom_call.1} parent=1 // pred_check
      _
    $region7: #{tpu_custom_call.1} parent=1 // pred_check_branch
      %23 = sbr.rel (0) target = $region9
    $region8: #{tpu_custom_call.1} parent=1 // pred_region
      %25 = vsyncadd [#allocation6], 0
      %s26 = sshll.u32 %s1, 4
      %s27 = int_to_ptr.hbm [resolvable:$true] %s26
      %s28 = sshll.u32 [#allocation5], 4
      %s29 = int_to_ptr.vmem [resolvable:$true] %s28
      %34 = dma.hbm_to_vmem [thread:$0]  %s27, 2048, %s29, [#allocation6], 128, 128, 8
    $region9: #{tpu_custom_call.1} parent=1 // pred_fallthru
      _
    // Predicated region
    $region10: #{tpu_custom_call.1} parent=1 // pred_check
      _
    $region11: #{tpu_custom_call.1} parent=1 // pred_check_branch
      %36 = sbr.rel (0) target = $region13
    $region12: #{tpu_custom_call.1} parent=1 // pred_region
      %38 = vsyncadd [#allocation6], 0
      %s39 = sshll.u32 %s2, 4
      %s40 = int_to_ptr.hbm [resolvable:$true] %s39
      %s41 = sshll.u32 [#allocation7], 4
      %s42 = int_to_ptr.vmem [resolvable:$true] %s41
      %47 = dma.hbm_to_vmem [thread:$0]  %s40, 2048, %s42, [#allocation6], 128, 128, 8
    $region13: #{tpu_custom_call.1} parent=1 // pred_fallthru
      _
    // Predicated region
    $region14: #{tpu_custom_call.1} parent=1 // pred_check
      _
    $region15: #{tpu_custom_call.1} parent=1 // pred_check_branch
      %49 = sbr.rel (0) target = $region17
    $region16: #{tpu_custom_call.1} parent=1 // pred_region
      %51 = dma.done [#allocation3], 128
    $region17: #{tpu_custom_call.1} parent=1 // pred_fallthru
      _
    // Predicated region
    $region18: #{tpu_custom_call.1} parent=1 // pred_check
      _
    $region19: #{tpu_custom_call.1} parent=1 // pred_check_branch
      %53 = sbr.rel (0) target = $region21
    $region20: #{tpu_custom_call.1} parent=1 // pred_region
      %55 = dma.done [#allocation6], 2048
    $region21: #{tpu_custom_call.1} parent=1 // pred_fallthru
      _
    // Predicated region
    $region22: #{tpu_custom_call.1} parent=1 // pred_check
      _
    $region23: #{tpu_custom_call.1} parent=1 // pred_check_branch
      %57 = sbr.rel (0) target = $region25
    $region24: #{tpu_custom_call.1} parent=1 // pred_region
      %59 = dma.done [#allocation6], 2048
    $region25: #{tpu_custom_call.1} parent=1 // pred_fallthru
      _
    %v60 = vld [vmem:[#allocation2] sm:$0xff]
    %v61 = vld [vmem:[#allocation5] sm:$0xff]
    %v62 = vld [vmem:[#allocation5 + $0x8] sm:$0xff]
    %v63 = vld [vmem:[#allocation5 + $0x10] sm:$0xff]
    %v64 = vld [vmem:[#allocation5 + $0x18] sm:$0xff]
    %v65 = vld [vmem:[#allocation5 + $0x20] sm:$0xff]
    %v66 = vld [vmem:[#allocation5 + $0x28] sm:$0xff]
    %v67 = vld [vmem:[#allocation5 + $0x30] sm:$0xff]
    %v68 = vld [vmem:[#allocation5 + $0x38] sm:$0xff]
    %v69 = vld [vmem:[#allocation5 + $0x40] sm:$0xff]
    %v70 = vld [vmem:[#allocation5 + $0x48] sm:$0xff]
    %v71 = vld [vmem:[#allocation5 + $0x50] sm:$0xff]
    %v72 = vld [vmem:[#allocation5 + $0x58] sm:$0xff]
    %v73 = vld [vmem:[#allocation5 + $0x60] sm:$0xff]
    %v74 = vld [vmem:[#allocation5 + $0x68] sm:$0xff]
    %v75 = vld [vmem:[#allocation5 + $0x70] sm:$0xff]
    %v76 = vld [vmem:[#allocation5 + $0x78] sm:$0xff]
    %77 = vmatpush.msra.mxu0 %v76
    %78 = vmatpush.msra.mxu0 %v75
    %79 = vmatpush.msra.mxu0 %v74
    %80 = vmatpush.msra.mxu0 %v73
    %81 = vmatpush.msra.mxu0 %v72
    %82 = vmatpush.msra.mxu0 %v71
    %83 = vmatpush.msra.mxu0 %v70
    %84 = vmatpush.msra.mxu0 %v69
    %85 = vmatpush.msra.mxu0 %v68
    %86 = vmatpush.msra.mxu0 %v67
    %87 = vmatpush.msra.mxu0 %v66
    %88 = vmatpush.msra.mxu0 %v65
    %89 = vmatpush.msra.mxu0 %v64
    %90 = vmatpush.msra.mxu0 %v63
    %91 = vmatpush.msra.mxu0 %v62
    %92 = vmatpush.msra.mxu0 %v61
    %93 = vmatmul.f32.gmra.mxu0 %v60
    %v94 = vpop.f32.mrf.mxu0
    %v95 = vadd.f32 0.0, %v94
    %96 = vdwg.mxu0
    %v97 = vmax.f32 %v95, 0.0
    %v98 = vld [vmem:[#allocation7] sm:$0xff]
    %v99 = vld [vmem:[#allocation7 + $0x8] sm:$0xff]
    %v100 = vld [vmem:[#allocation7 + $0x10] sm:$0xff]
    %v101 = vld [vmem:[#allocation7 + $0x18] sm:$0xff]
    %v102 = vld [vmem:[#allocation7 + $0x20] sm:$0xff]
    %v103 = vld [vmem:[#allocation7 + $0x28] sm:$0xff]
    %v104 = vld [vmem:[#allocation7 + $0x30] sm:$0xff]
    %v105 = vld [vmem:[#allocation7 + $0x38] sm:$0xff]
    %v106 = vld [vmem:[#allocation7 + $0x40] sm:$0xff]
    %v107 = vld [vmem:[#allocation7 + $0x48] sm:$0xff]
    %v108 = vld [vmem:[#allocation7 + $0x50] sm:$0xff]
    %v109 = vld [vmem:[#allocation7 + $0x58] sm:$0xff]
    %v110 = vld [vmem:[#allocation7 + $0x60] sm:$0xff]
    %v111 = vld [vmem:[#allocation7 + $0x68] sm:$0xff]
    %v112 = vld [vmem:[#allocation7 + $0x70] sm:$0xff]
    %v113 = vld [vmem:[#allocation7 + $0x78] sm:$0xff]
    %114 = vmatpush.msra.mxu0 %v113
    %115 = vmatpush.msra.mxu0 %v112
    %116 = vmatpush.msra.mxu0 %v111
    %117 = vmatpush.msra.mxu0 %v110
    %118 = vmatpush.msra.mxu0 %v109
    %119 = vmatpush.msra.mxu0 %v108
    %120 = vmatpush.msra.mxu0 %v107
    %121 = vmatpush.msra.mxu0 %v106
    %122 = vmatpush.msra.mxu0 %v105
    %123 = vmatpush.msra.mxu0 %v104
    %124 = vmatpush.msra.mxu0 %v103
    %125 = vmatpush.msra.mxu0 %v102
    %126 = vmatpush.msra.mxu0 %v101
    %127 = vmatpush.msra.mxu0 %v100
    %128 = vmatpush.msra.mxu0 %v99
    %129 = vmatpush.msra.mxu0 %v98
    %130 = vmatmul.f32.gmra.mxu0 %v97
    %v131 = vpop.f32.mrf.mxu0
    %v132 = vadd.f32 0.0, %v131
    %133 = vdwg.mxu0
    %v134 = vmax.f32 %v132, 0.0
    %135 = vst [vmem:[#allocation8] sm:$0xff] %v134
    // Predicated region
    $region26: #{tpu_custom_call.1} parent=1 // pred_check
      _
    $region27: #{tpu_custom_call.1} parent=1 // pred_check_branch
      %137 = sbr.rel (0) target = $region29
    $region28: #{tpu_custom_call.1} parent=1 // pred_region
      %139 = vsyncadd [#allocation4], 0
      %s141 = sshll.u32 [#allocation8], 4
      %s142 = int_to_ptr.vmem [resolvable:$true] %s141
      %s143 = sshll.u32 %s3, 4
      %s144 = int_to_ptr.hbm [resolvable:$true] %s143
      %146 = dma.vmem_to_hbm [thread:$0]  %s142, 128, %s144, [#allocation4]
    $region29: #{tpu_custom_call.1} parent=1 // pred_fallthru
      _
    // Predicated region
    $region30: #{tpu_custom_call.1} parent=1 // pred_check
      _
    $region31: #{tpu_custom_call.1} parent=1 // pred_check_branch
      %148 = sbr.rel (0) target = $region33
    $region32: #{tpu_custom_call.1} parent=1 // pred_region
      %150 = dma.done [#allocation4], 128
    $region33: #{tpu_custom_call.1} parent=1 // pred_fallthru
      _
    %151 = vsyncpa [#allocation3], 1
    %152 = vsyncpa [#allocation6], 1
    %153 = vsyncpa [#allocation4], 1

</llo_original>
